<compile_context>
chip_gen: v5e
topology: v5e:2x2
jax: 0.10.0
libtpu: 0.0.40
codegen_flags: <defaults>
</compile_context>

<pallas_src>
import functools

import jax
import jax.numpy as jnp
from jax import lax
from jax.experimental import pallas as pl
from jax.experimental.pallas import tpu as pltpu


_VMEM_LIMIT = 48 << 20   # safe on v5e/v6e (128 MiB phys) and v7x (64 MiB phys)


# ------------------------------ tiling helpers -------------------------------

def _round_up(x, m):
    return ((x + m - 1) // m) * m


def _pick_tile(dim, target, align):
    """Largest `align`-multiple tile <= target (and <= the align-padded dim).
    Non-divisible shapes are handled by zero-padding in the wrapper, so there
    is no whole-array fallback (no VMEM blow-up on awkward shapes)."""
    dim_pad = _round_up(dim, align)
    t = max(align, (min(target, dim_pad) // align) * align)
    return min(t, dim_pad)


def _pick_row_tile(dim, target, align):
    """Row (parallel-axis) tile; additionally capped near half the padded dim
    so the 'parallel' grid axis has >= 2 blocks (v7x megacore sharding)."""
    t = _pick_tile(dim, target, align)
    dim_pad = _round_up(dim, align)
    if dim_pad >= 2 * align:
        t = min(t, _round_up(pl.cdiv(dim_pad, 2), align))
    return t


def _pad2(a, rows, cols):
    r, c = a.shape
    if r == rows and c == cols:
        return a
    return jnp.pad(a, ((0, rows - r), (0, cols - c)))


# --------------- mv branch: out = W @ x : (N,M)@(M,) -> (N,) ----------------

def _mv_kernel(w_ref, x_ref, o_ref, *, k_splits):
    # grid = (N/TN, M/TK); reduction (K) axis is last and the output block
    # index is constant across it, so o_ref stays VMEM-resident and is used
    # directly as the f32 accumulator (no scratch, no finalize copy).
    k = pl.program_id(1)

    @pl.when(k == 0)
    def _():
        o_ref[...] = jnp.zeros_like(o_ref)

    # x is fully VMEM-resident as (num_k_tiles, TK): select this step's K-slice
    # with a second-minor dynamic index (no per-row-tile re-DMA of x).
    xk = x_ref[pl.ds(k, 1), :].astype(jnp.bfloat16)       # (1, TK)
    w = w_ref[...].astype(jnp.bfloat16)                   # (TN, TK)

    # bf16 operands -> single MXU pass (no f32 multi-pass decomposition) while
    # W stays f32 in HBM; f32 accumulation.  Split the GEMV into independent
    # half-K dots so both MXUs stream the weight tile concurrently.
    tk = w.shape[1]
    chunk = tk // k_splits
    part = None
    for s in range(k_splits):
        lo = s * chunk
        d = lax.dot_general(
            xk[:, lo:lo + chunk], w[:, lo:lo + chunk],
            dimension_numbers=(((1,), (1,)), ((), ())),
            preferred_element_type=jnp.float32)            # (1, TN) lane-dense
        part = d if part is None else part + d
    o_ref[...] += part


@functools.partial(jax.jit, static_argnames=("tn_target", "tk_target"))
def mv_pallas(weight, x, *, tn_target=512, tk_target=2048):
    """weight @ x : (N, M) @ (M,) -> (N,).  bf16 MXU GEMV with f32 accumulation."""
    N, M = weight.shape
    TN = _pick_row_tile(N, tn_target, 128)   # lane axis of the (1, TN) output
    TK = _pick_tile(M, tk_target, 128)
    N_pad, M_pad = _round_up(N, TN), _round_up(M, TK)

    w = _pad2(weight, N_pad, M_pad)                        # zero-pad: exact GEMV
    xp = jnp.pad(x, (0, M_pad - M)) if M_pad != M else x
    x2 = xp.reshape(M_pad // TK, TK)                       # one row per K-tile

    k_splits = 2 if TK % 256 == 0 else 1
    kernel = functools.partial(_mv_kernel, k_splits=k_splits)

    out = pl.pallas_call(
        kernel,
        out_shape=jax.ShapeDtypeStruct((1, N_pad), weight.dtype),
        grid_spec=pltpu.PrefetchScalarGridSpec(
            num_scalar_prefetch=0,
            grid=(N_pad // TN, M_pad // TK),
            in_specs=[
                pl.BlockSpec((TN, TK), lambda i, k: (i, k)),           # stream W
                pl.BlockSpec((M_pad // TK, TK), lambda i, k: (0, 0)),  # x resident
            ],
            out_specs=pl.BlockSpec((1, TN), lambda i, k: (0, i)),
        ),
        compiler_params=pltpu.CompilerParams(
            dimension_semantics=("parallel", "arbitrary"),
            vmem_limit_bytes=_VMEM_LIMIT),
    )(w, x2)
    return out.reshape(N_pad)[:N]


# --------------- add branch: out = W + x : (N,M)+(M,) -> (N,M) ---------------

def _add_kernel(w_ref, x_ref, o_ref):
    # Broadcast add along the sublane (row) axis on the VPU.  x is fully
    # VMEM-resident as (num_col_tiles, TM); grab this column tile's row.
    j = pl.program_id(1)
    o_ref[...] = w_ref[...] + x_ref[pl.ds(j, 1), :]


@functools.partial(jax.jit, static_argnames=("tn_target", "tm_target"))
def add_pallas(weight, x, *, tn_target=512, tm_target=2048):
    """weight + x : (N, M) + (M,) -> (N, M)."""
    N, M = weight.shape
    TN = _pick_row_tile(N, tn_target, 8)
    TM = _pick_tile(M, tm_target, 128)
    N_pad, M_pad = _round_up(N, TN), _round_up(M, TM)

    w = _pad2(weight, N_pad, M_pad)
    xp = jnp.pad(x, (0, M_pad - M)) if M_pad != M else x
    x2 = xp.reshape(M_pad // TM, TM)

    out = pl.pallas_call(
        _add_kernel,
        out_shape=jax.ShapeDtypeStruct((N_pad, M_pad), weight.dtype),
        grid_spec=pltpu.PrefetchScalarGridSpec(
            num_scalar_prefetch=0,
            grid=(N_pad // TN, M_pad // TM),
            in_specs=[
                pl.BlockSpec((TN, TM), lambda i, j: (i, j)),           # stream W
                pl.BlockSpec((M_pad // TM, TM), lambda i, j: (0, 0)),  # x resident
            ],
            out_specs=pl.BlockSpec((TN, TM), lambda i, j: (i, j)),
        ),
        compiler_params=pltpu.CompilerParams(
            dimension_semantics=("parallel", "parallel"),
            vmem_limit_bytes=_VMEM_LIMIT),
    )(w, x2)
    return out[:N, :M]


# ------------------------------- forward -------------------------------------

def my_module_forward(weight, x):
    """Mirrors MyModule.forward.

    The branch changes the OUTPUT SHAPE, so it must be resolved from the
    concrete value of input.sum().  jnp.sum(x) is dispatched asynchronously;
    the single blocking D2H sync happens at the bool() conversion just before
    the kernel dispatch.
    """
    s = jnp.sum(x)            # device op, issued asynchronously
    if bool(s > 0):           # single D2H sync
        return mv_pallas(weight, x)      # shape (N,)
    else:
        return add_pallas(weight, x)     # shape (N, M)


# --------------------------------- demo ---------------------------------------

if __name__ == "__main__":
    key = jax.random.PRNGKey(0)

    # (3,4)  : the tiny shape from the original torch script (exercises padding)
    # (8,128): aligned single-block case
    # (256,4096): multi-block grid on both axes (2 row blocks x 2 K blocks),
    #             exercises the split-K MXU path and accumulate-into-output.
    for (N, M) in [(3, 4), (8, 128), (256, 4096)]:
        k_w, k_x = jax.random.split(jax.random.fold_in(key, N * 100003 + M))

        # Deterministic parameter init (torch.rand -> uniform [0,1), float32).
        weight = jax.random.uniform(k_w, (N, M), dtype=jnp.float32)

        # Branch 1: positive-sum input -> matrix-vector product.
        x_pos = jax.random.uniform(k_x, (M,), dtype=jnp.float32)
        out_mv = jax.block_until_ready(my_module_forward(weight, x_pos))
        ref_mv = weight @ x_pos
        assert out_mv.shape == (N,)
        # bf16 MXU operands: worst-case relative error of the all-positive dot
        # is ~2^-8; rtol=1e-2 gives ample deterministic margin.
        assert jnp.allclose(out_mv, ref_mv, atol=1e-2, rtol=1e-2), (N, M)

        # Branch 2: non-positive-sum input -> broadcast add (exact f32 VPU add).
        x_neg = -x_pos
        out_add = jax.block_until_ready(my_module_forward(weight, x_neg))
        ref_add = weight + x_neg
        assert out_add.shape == (N, M)
        assert jnp.allclose(out_add, ref_add, atol=1e-6, rtol=1e-6), (N, M)

    print("KERNEL_OK")
</pallas_src>

<mosaic_0001>
module attributes {stable_mosaic.version = 11 : i64} {
  func.func @_mv_kernel(%arg0: i32, %arg1: i32, %arg2: memref<128x128xf32, #tpu.memory_space<vmem>>, %arg3: memref<1x128xf32, #tpu.memory_space<vmem>>, %arg4: memref<1x128xf32, #tpu.memory_space<vmem>>) attributes {dimension_semantics = [#tpu.dimension_semantics<parallel>, #tpu.dimension_semantics<arbitrary>], iteration_bounds = array<i64: 1, 1>, scalar_prefetch = 0 : i64, scratch_operands = 0 : i64, tpu.core_type = #tpu.core_type<tc>, window_params = [{transform_indices = @transform_0, window_bounds = array<i64: 128, 128>}, {pipeline_mode = #tpu.pipeline_mode<synchronous>, transform_indices = @transform_1, window_bounds = array<i64: 1, 128>}, {transform_indices = @transform_2, window_bounds = array<i64: 1, 128>}]} {
    %c0_i32 = arith.constant 0 : i32
    %0 = arith.cmpi eq, %arg1, %c0_i32 : i32
    %1 = arith.extui %0 : i1 to i32
    %c0_i32_0 = arith.constant 0 : i32
    %2 = arith.cmpi ne, %1, %c0_i32_0 : i32
    scf.if %2 {
      %cst_7 = arith.constant 0.000000e+00 : f32
      %12 = vector.broadcast %cst_7 : f32 to vector<1x128xf32>
      %c0_8 = arith.constant 0 : index
      %c0_9 = arith.constant 0 : index
      %13 = vector.load %arg4[%c0_8, %c0_9] : memref<1x128xf32, #tpu.memory_space<vmem>>, vector<1x128xf32>
      tpu.vector_store %arg4[%c0_8, %c0_9], %12 {strides = array<i32>} : memref<1x128xf32, #tpu.memory_space<vmem>>, vector<1x128xf32>,
    } else {
    }
    %3 = arith.index_cast %arg1 : i32 to index
    %c0 = arith.constant 0 : index
    %4 = vector.load %arg3[%3, %c0] : memref<1x128xf32, #tpu.memory_space<vmem>>, vector<1x128xf32>
    %5 = arith.truncf %4 : vector<1x128xf32> to vector<1x128xbf16>
    %c0_1 = arith.constant 0 : index
    %c0_2 = arith.constant 0 : index
    %6 = vector.load %arg2[%c0_1, %c0_2] : memref<128x128xf32, #tpu.memory_space<vmem>>, vector<128x128xf32>
    %7 = arith.truncf %6 : vector<128x128xf32> to vector<128x128xbf16>
    %cst = arith.constant dense<0.000000e+00> : vector<1x128xf32>
    %8 = tpu.matmul %5, %7, %cst {dimension_numbers = #tpu.dot_dimension_numbers<[1], [1], [0], [0], [0, 0, 1, 0], [], []>} : vector<1x128xbf16>, vector<128x128xbf16>, vector<1x128xf32> -> vector<1x128xf32>
    %c0_3 = arith.constant 0 : index
    %c0_4 = arith.constant 0 : index
    %9 = vector.load %arg4[%c0_3, %c0_4] : memref<1x128xf32, #tpu.memory_space<vmem>>, vector<1x128xf32>
    %10 = arith.addf %9, %8 : vector<1x128xf32>
    %c0_5 = arith.constant 0 : index
    %c0_6 = arith.constant 0 : index
    %11 = vector.load %arg4[%c0_5, %c0_6] : memref<1x128xf32, #tpu.memory_space<vmem>>, vector<1x128xf32>
    tpu.vector_store %arg4[%c0_5, %c0_6], %10 {strides = array<i32>} : memref<1x128xf32, #tpu.memory_space<vmem>>, vector<1x128xf32>,
    return
  }
  func.func @transform_0(%arg0: i32, %arg1: i32) -> (i32, i32) {
    %c0_i32 = arith.constant 0 : i32
    return %arg0, %arg1 : i32, i32
  }
  func.func @transform_1(%arg0: i32, %arg1: i32) -> (i32, i32) {
    %c0_i32 = arith.constant 0 : i32
    %c0_i32_0 = arith.constant 0 : i32
    %c0_i32_1 = arith.constant 0 : i32
    return %c0_i32, %c0_i32_0 : i32, i32
  }
  func.func @transform_2(%arg0: i32, %arg1: i32) -> (i32, i32) {
    %c0_i32 = arith.constant 0 : i32
    %c0_i32_0 = arith.constant 0 : i32
    return %c0_i32, %arg0 : i32, i32
  }
}

</mosaic_0001>

<llo_original>
// kernel: mv_pallas.1
$region0: #{mv_pallas.1}
  #allocation0 [shape = 'u32[]', space=smem, size = 0x4, offset = 0x4, fixed_abs, tag = 'smem constant byte address 0x4 - core index']
  #allocation1 [shape = 'u32[72,128]{1,0:T(1,128)}', space=vmem, size = 0x9000, scoped, tag = 'internal scratch']
  %s0 = inlined_call_operand.vmem [shape: f32[128,128], index: 0, kind: input, shape index: {}]
  %s1 = inlined_call_operand.vmem [shape: f32[1,128], index: 1, kind: input, shape index: {}]
  %s2 = inlined_call_operand.vmem [shape: f32[1,128], index: 2, kind: output, shape index: {}]
  %s3 = sld [smem:[#allocation0]]
  $region22: #{mv_pallas.1} parent=0
    _
  %s5 = ssub.s32 1, %s3
  %s6 = scalar_select 0, %s5, %s3
  // Predicated region
  $region2: #{mv_pallas.1} parent=0 // pred_check
    _
  $region3: #{mv_pallas.1} parent=0 // pred_check_branch
    %8 = sbr.rel (0) target = $region5
  $region4: #{mv_pallas.1} parent=0 // pred_region
    _
  $region5: #{mv_pallas.1} parent=0 // pred_fallthru
    _
  // Predicated region
  $region6: #{mv_pallas.1} parent=0 // pred_check
    _
  $region7: #{mv_pallas.1} parent=0 // pred_check_branch
    %10 = sbr.rel (0) target = $region9
  $region8: #{mv_pallas.1} parent=0 // pred_region
    _
  $region9: #{mv_pallas.1} parent=0 // pred_fallthru
    _
  %p11 = scmp.eq.s32.totalorder 0, 0
  // Predicated region
  $region10: #{mv_pallas.1} parent=0 // pred_check
    %p12 = pneg %p11
  $region11: #{mv_pallas.1} parent=0 // pred_check_branch
    %14 = sbr.rel (%p12) target = $region13
  $region12: #{mv_pallas.1} parent=0 // pred_region
    %15 = vst [vmem:[%s2] sm:$0x1] 0.0
  $region13: #{mv_pallas.1} parent=0 // pred_fallthru
    _
  %v16 = vld [vmem:[%s1] sm:$0x1]
  %v17 = vpack.c.bf16 %v16, %v16
  %v18 = vld [vmem:[%s0] sm:$0xff]
  %v19 = vld [vmem:[%s0 + $0x8] sm:$0xff]
  %v20 = vld [vmem:[%s0 + $0x10] sm:$0xff]
  %v21 = vld [vmem:[%s0 + $0x18] sm:$0xff]
  %v22 = vld [vmem:[%s0 + $0x20] sm:$0xff]
  %v23 = vld [vmem:[%s0 + $0x28] sm:$0xff]
  %v24 = vld [vmem:[%s0 + $0x30] sm:$0xff]
  %v25 = vld [vmem:[%s0 + $0x38] sm:$0xff]
  %v26 = vld [vmem:[%s0 + $0x40] sm:$0xff]
  %v27 = vld [vmem:[%s0 + $0x48] sm:$0xff]
  %v28 = vld [vmem:[%s0 + $0x50] sm:$0xff]
  %v29 = vld [vmem:[%s0 + $0x58] sm:$0xff]
  %v30 = vld [vmem:[%s0 + $0x60] sm:$0xff]
  %v31 = vld [vmem:[%s0 + $0x68] sm:$0xff]
  %v32 = vld [vmem:[%s0 + $0x70] sm:$0xff]
  %v33 = vld [vmem:[%s0 + $0x78] sm:$0xff]
  %v34 = vpack.c.bf16 %v19, %v18
  %v35 = vpack.c.bf16 %v21, %v20
  %v36 = vpack.c.bf16 %v23, %v22
  %v37 = vpack.c.bf16 %v25, %v24
  %v38 = vpack.c.bf16 %v27, %v26
  %v39 = vpack.c.bf16 %v29, %v28
  %v40 = vpack.c.bf16 %v31, %v30
  %v41 = vpack.c.bf16 %v33, %v32
  %42 = vmatpush.bf16.xpose.msra.mxu0 %v41
  %43 = vmatpush.bf16.xpose.msra.mxu0 %v40
  %44 = vmatpush.bf16.xpose.msra.mxu0 %v39
  %45 = vmatpush.bf16.xpose.msra.mxu0 %v38
  %46 = vmatpush.bf16.xpose.msra.mxu0 %v37
  %47 = vmatpush.bf16.xpose.msra.mxu0 %v36
  %48 = vmatpush.bf16.xpose.msra.mxu0 %v35
  %49 = vmatpush.bf16.xpose.msra.mxu0 %v34
  %50 = vmatmul.bf16.gmra.mxu0 %v17
  %v51 = vpop.f32.mrf.mxu0
  %v52 = vadd.f32 0.0, %v51
  %v53 = vpop.f32.mrf.mxu0
  %54 = vdwg.mxu0
  %v55 = vld [vmem:[%s2] sm:$0x1]
  %v56 = vadd.f32 %v55, %v52
  %57 = vst [vmem:[%s2] sm:$0x1] %v56
  // Predicated region
  $region14: #{mv_pallas.1} parent=0 // pred_check
    _
  $region15: #{mv_pallas.1} parent=0 // pred_check_branch
    %59 = sbr.rel (0) target = $region17
  $region16: #{mv_pallas.1} parent=0 // pred_region
    _
  $region17: #{mv_pallas.1} parent=0 // pred_fallthru
    _
  // Predicated region
  $region18: #{mv_pallas.1} parent=0 // pred_check
    _
  $region19: #{mv_pallas.1} parent=0 // pred_check_branch
    %61 = sbr.rel (0) target = $region21
  $region20: #{mv_pallas.1} parent=0 // pred_region
    _
  $region21: #{mv_pallas.1} parent=0 // pred_fallthru
    _

</llo_original>
